<compile_context>
chip_gen: v5e
topology: v5e:2x2
jax: 0.10.0
libtpu: 0.0.40
codegen_flags: <defaults>
</compile_context>

<pallas_src>
import jax
import jax.numpy as jnp
import numpy as np
from jax.experimental import pallas as pl
from jax.experimental.pallas import tpu as pltpu

NEG_SLOPE = 0.01   # torch.nn.LeakyReLU default negative_slope
LN_EPS = 1e-5      # torch.nn.LayerNorm default eps

# Fixed hyperparameters of this instance (also used for the packed-slab layout).
F_X = 8            # node feature dim
F_U = 4            # global feature dim
HIDDEN = 32        # hidden_size
OUT_SIZE = 16      # out_size
IN_PAD = 16        # padded concat width: [u(4) pad(4) | mean(8)], ones col at lane F_X
HP = 128           # lane-padded hidden width
OP = 128           # lane-padded output width

# Row offsets inside the packed parameter slab (all multiples of 8).
W1_OFF = 0                 # [IN_PAD, HP]
W2_OFF = W1_OFF + IN_PAD   # [HP, HP]
W3_OFF = W2_OFF + HP       # [HP, OP]
VEC_OFF = W3_OFF + HP      # [8, OP]: rows = b1, b2, b3, gamma, beta, 0, 0, 0
P_ROWS = VEC_OFF + 8       # 280


def _leaky_relu(z):
    return jnp.where(z > 0, z, NEG_SLOPE * z)


def global_model_kernel(batch_ref, xa_ref, u_ref, p_ref, out_ref):
    B = u_ref.shape[0]
    N = xa_ref.shape[0]

    # --- scatter_mean(x, batch) via one-hot matmul; counts folded in as the
    #     extra ones-column of xa (lane F_X) so a single MXU pass gives both ---
    batch = batch_ref[0, :]                                          # [N] int32
    gid = jax.lax.broadcasted_iota(jnp.int32, (B, N), 0)             # [B, N]
    onehot = (gid == batch[None, :]).astype(jnp.float32)             # [B, N]
    s = jnp.dot(onehot, xa_ref[...], preferred_element_type=jnp.float32)  # [B, IN_PAD]
    counts = s[:, F_X:F_X + 1]                                       # [B, 1]
    inv = pl.reciprocal(jnp.maximum(counts, 1.0), approx=False)      # EUP
    mean = s[:, :F_X] * inv                                          # [B, F_X]

    # cat([u, mean], dim=1): u comes in pre-padded to 8 lanes -> [B, 16]
    h_in = jnp.concatenate([u_ref[...], mean], axis=1)               # [B, IN_PAD]

    # --- packed parameter slab views (static, 8-row-aligned slices) ---
    w1 = p_ref[W1_OFF:W1_OFF + IN_PAD, :]                            # [16, 128]
    w2 = p_ref[W2_OFF:W2_OFF + HP, :]                                # [128, 128]
    w3 = p_ref[W3_OFF:W3_OFF + HP, :]                                # [128, 128]
    vec = p_ref[VEC_OFF:VEC_OFF + 8, :]                              # [8, 128]
    b1, b2, b3 = vec[0:1, :], vec[1:2, :], vec[2:3, :]
    gamma, beta = vec[3:4, :], vec[4:5, :]

    # --- global_mlp (lane-padded; padded lanes stay exactly 0 throughout) ---
    h = _leaky_relu(jnp.dot(h_in, w1, preferred_element_type=jnp.float32) + b1)
    h = _leaky_relu(jnp.dot(h, w2, preferred_element_type=jnp.float32) + b2)
    y = _leaky_relu(jnp.dot(h, w3, preferred_element_type=jnp.float32) + b3)   # [B, 128]

    # LayerNorm over the real OUT_SIZE lanes only (lane mask; padded lanes are 0)
    lane = jax.lax.broadcasted_iota(jnp.int32, (B, OP), 1)
    lmask = (lane < OUT_SIZE).astype(jnp.float32)
    mu = jnp.sum(y * lmask, axis=-1, keepdims=True) * (1.0 / OUT_SIZE)
    cen = (y - mu) * lmask
    var = jnp.sum(cen * cen, axis=-1, keepdims=True) * (1.0 / OUT_SIZE)
    out_ref[...] = cen * jax.lax.rsqrt(var + LN_EPS) * gamma + beta


def pack_params(params):
    """Pack the 9 parameter tensors into one lane-dense [P_ROWS, 128] f32 slab."""
    slab = jnp.zeros((P_ROWS, OP), jnp.float32)
    slab = slab.at[W1_OFF:W1_OFF + F_U, :HIDDEN].set(params["w1u"])          # u rows (lanes 0..3 of h_in)
    slab = slab.at[W1_OFF + F_X:W1_OFF + 2 * F_X, :HIDDEN].set(params["w1x"])  # mean rows (lanes 8..15)
    slab = slab.at[W2_OFF:W2_OFF + HIDDEN, :HIDDEN].set(params["w2"])
    slab = slab.at[W3_OFF:W3_OFF + HIDDEN, :OUT_SIZE].set(params["w3"])
    slab = slab.at[VEC_OFF + 0, :HIDDEN].set(params["b1"][0])
    slab = slab.at[VEC_OFF + 1, :HIDDEN].set(params["b2"][0])
    slab = slab.at[VEC_OFF + 2, :OUT_SIZE].set(params["b3"][0])
    slab = slab.at[VEC_OFF + 3, :OUT_SIZE].set(params["gamma"][0])
    slab = slab.at[VEC_OFF + 4, :OUT_SIZE].set(params["beta"][0])
    return slab


def global_model_forward(x, edge_index, edge_attr, u, batch, p_slab):
    # edge_index / edge_attr are unused by GlobalModel.forward (signature parity).
    del edge_index, edge_attr
    N = x.shape[0]
    B = u.shape[0]
    batch2d = batch.reshape(1, -1).astype(jnp.int32)

    # x augmented with a ones column (for counts), lane-padded to IN_PAD.
    xa = jnp.zeros((N, IN_PAD), jnp.float32)
    xa = xa.at[:, :F_X].set(x.astype(jnp.float32)).at[:, F_X].set(1.0)
    # u padded to 8 lanes so [u_pad | mean] is a clean 16-lane concat.
    u_pad = jnp.zeros((B, F_X), jnp.float32).at[:, :F_U].set(u.astype(jnp.float32))

    flops = 2 * B * N * IN_PAD + 2 * B * (IN_PAD * HP + HP * HP + HP * OP)
    bytes_accessed = 4 * (batch2d.size + xa.size + u_pad.size + p_slab.size + B * OP)

    out = pl.pallas_call(
        global_model_kernel,
        out_shape=jax.ShapeDtypeStruct((B, OP), jnp.float32),
        in_specs=[pl.BlockSpec(memory_space=pltpu.MemorySpace.VMEM)] * 4,
        out_specs=pl.BlockSpec(memory_space=pltpu.MemorySpace.VMEM),
        cost_estimate=pl.CostEstimate(flops=flops, transcendentals=3 * B,
                                      bytes_accessed=bytes_accessed),
    )(batch2d, xa, u_pad, p_slab)
    return out[:, :OUT_SIZE]


def init_params(key, f_u, f_x, hidden_size, out_size):
    """Deterministic init mimicking torch Linear default (uniform +/- 1/sqrt(fan_in))."""
    in_size = f_u + f_x
    keys = jax.random.split(key, 3)

    def lin(k, fan_in, fan_out):
        bound = 1.0 / np.sqrt(fan_in)
        kw, kb = jax.random.split(k)
        w = jax.random.uniform(kw, (fan_in, fan_out), jnp.float32, -bound, bound)
        b = jax.random.uniform(kb, (1, fan_out), jnp.float32, -bound, bound)
        return w, b

    w1, b1 = lin(keys[0], in_size, hidden_size)
    w2, b2 = lin(keys[1], hidden_size, hidden_size)
    w3, b3 = lin(keys[2], hidden_size, out_size)
    return {
        "w1u": w1[:f_u, :], "w1x": w1[f_u:, :], "b1": b1,
        "w2": w2, "b2": b2,
        "w3": w3, "b3": b3,
        "gamma": jnp.ones((1, out_size), jnp.float32),
        "beta": jnp.zeros((1, out_size), jnp.float32),
    }


def reference_forward(x, u, batch, params):
    """Plain-JAX reference of the same math (for the correctness check)."""
    B = u.shape[0]
    one_hot = (jnp.arange(B)[:, None] == batch[None, :]).astype(jnp.float32)
    mean = (one_hot @ x) / jnp.maximum(one_hot.sum(1, keepdims=True), 1.0)
    out = jnp.concatenate([u, mean], axis=1)
    w1 = jnp.concatenate([params["w1u"], params["w1x"]], axis=0)
    h = jax.nn.leaky_relu(out @ w1 + params["b1"], NEG_SLOPE)
    h = jax.nn.leaky_relu(h @ params["w2"] + params["b2"], NEG_SLOPE)
    y = jax.nn.leaky_relu(h @ params["w3"] + params["b3"], NEG_SLOPE)
    mu = y.mean(-1, keepdims=True)
    var = ((y - mu) ** 2).mean(-1, keepdims=True)
    y = (y - mu) * jax.lax.rsqrt(var + LN_EPS)
    return y * params["gamma"] + params["beta"]


if __name__ == "__main__":
    key = jax.random.PRNGKey(0)
    k_x, k_u, k_e, k_p = jax.random.split(key, 4)

    B, N = 2, 16          # graphs, total nodes

    x = jax.random.normal(k_x, (N, F_X), jnp.float32)
    u = jax.random.normal(k_u, (B, F_U), jnp.float32)
    batch = jnp.concatenate([jnp.zeros(N // 2, jnp.int32), jnp.ones(N - N // 2, jnp.int32)])
    edge_index = jnp.zeros((2, 4), jnp.int32)        # unused by GlobalModel.forward
    edge_attr = jnp.zeros((4, 3), jnp.float32)       # unused by GlobalModel.forward

    params = init_params(k_p, F_U, F_X, HIDDEN, OUT_SIZE)
    p_slab = pack_params(params)

    out = global_model_forward(x, edge_index, edge_attr, u, batch, p_slab)
    out = jax.block_until_ready(out)

    ref = reference_forward(x, u, batch, params)
    assert out.shape == (B, OUT_SIZE)
    np.testing.assert_allclose(np.asarray(out), np.asarray(ref), rtol=1e-5, atol=1e-5)

    print("KERNEL_OK")
</pallas_src>

<mosaic_0001>
module attributes {stable_mosaic.version = 11 : i64} {
  func.func @global_model_kernel(%arg0: memref<1x16xi32, #tpu.memory_space<vmem>>, %arg1: memref<16x16xf32, #tpu.memory_space<vmem>>, %arg2: memref<2x8xf32, #tpu.memory_space<vmem>>, %arg3: memref<280x128xf32, #tpu.memory_space<vmem>>, %arg4: memref<2x128xf32, #tpu.memory_space<vmem>>) attributes {dimension_semantics = [], scalar_prefetch = 0 : i64, scratch_operands = 0 : i64, tpu.core_type = #tpu.core_type<tc>} {
    %c0 = arith.constant 0 : index
    %c0_0 = arith.constant 0 : index
    %0 = vector.load %arg0[%c0, %c0_0] : memref<1x16xi32, #tpu.memory_space<vmem>>, vector<1x16xi32>
    %1 = vector.shape_cast %0 : vector<1x16xi32> to vector<16xi32>
    %2 = tpu.iota {dimensions = array<i32: 0>} : vector<2x16xi32>
    %3 = vector.shape_cast %1 : vector<16xi32> to vector<1x16xi32>
    %4 = vector.broadcast %3 : vector<1x16xi32> to vector<2x16xi32>
    %5 = arith.cmpi eq, %2, %4 : vector<2x16xi32>
    %6 = arith.extui %5 : vector<2x16xi1> to vector<2x16xi32>
    %7 = arith.sitofp %6 : vector<2x16xi32> to vector<2x16xf32>
    %c0_1 = arith.constant 0 : index
    %c0_2 = arith.constant 0 : index
    %8 = vector.load %arg1[%c0_1, %c0_2] : memref<16x16xf32, #tpu.memory_space<vmem>>, vector<16x16xf32>
    %cst = arith.constant dense<0.000000e+00> : vector<2x16xf32>
    %9 = tpu.matmul %7, %8, %cst {dimension_numbers = #tpu.dot_dimension_numbers<[1], [0], [0], [1], [0, 0, 1, 1], [], []>} : vector<2x16xf32>, vector<16x16xf32>, vector<2x16xf32> -> vector<2x16xf32>
    %10 = vector.extract_strided_slice %9 {offsets = [0, 8], sizes = [2, 1], strides = [1, 1]} : vector<2x16xf32> to vector<2x1xf32>
    %cst_3 = arith.constant 1.000000e+00 : f32
    %11 = vector.broadcast %cst_3 : f32 to vector<2x1xf32>
    %12 = arith.maximumf %10, %11 : vector<2x1xf32>
    %13 = tpu.reciprocal %12 : vector<2x1xf32> -> vector<2x1xf32>
    %14 = vector.extract_strided_slice %9 {offsets = [0, 0], sizes = [2, 8], strides = [1, 1]} : vector<2x16xf32> to vector<2x8xf32>
    %15 = vector.broadcast %13 : vector<2x1xf32> to vector<2x8xf32>
    %16 = arith.mulf %14, %15 : vector<2x8xf32>
    %c0_4 = arith.constant 0 : index
    %c0_5 = arith.constant 0 : index
    %17 = vector.load %arg2[%c0_4, %c0_5] : memref<2x8xf32, #tpu.memory_space<vmem>>, vector<2x8xf32>
    %18 = tpu.concatenate %17, %16 in 1 : vector<2x8xf32>, vector<2x8xf32> -> vector<2x16xf32>
    %c0_6 = arith.constant 0 : index
    %c0_7 = arith.constant 0 : index
    %19 = vector.load %arg3[%c0_6, %c0_7] : memref<280x128xf32, #tpu.memory_space<vmem>>, vector<16x128xf32>
    %c16 = arith.constant 16 : index
    %c0_8 = arith.constant 0 : index
    %20 = vector.load %arg3[%c16, %c0_8] : memref<280x128xf32, #tpu.memory_space<vmem>>, vector<128x128xf32>
    %c144 = arith.constant 144 : index
    %c0_9 = arith.constant 0 : index
    %21 = vector.load %arg3[%c144, %c0_9] : memref<280x128xf32, #tpu.memory_space<vmem>>, vector<128x128xf32>
    %c272 = arith.constant 272 : index
    %c0_10 = arith.constant 0 : index
    %22 = vector.load %arg3[%c272, %c0_10] : memref<280x128xf32, #tpu.memory_space<vmem>>, vector<8x128xf32>
    %23 = vector.extract_strided_slice %22 {offsets = [0, 0], sizes = [1, 128], strides = [1, 1]} : vector<8x128xf32> to vector<1x128xf32>
    %24 = vector.extract_strided_slice %22 {offsets = [1, 0], sizes = [1, 128], strides = [1, 1]} : vector<8x128xf32> to vector<1x128xf32>
    %25 = vector.extract_strided_slice %22 {offsets = [2, 0], sizes = [1, 128], strides = [1, 1]} : vector<8x128xf32> to vector<1x128xf32>
    %26 = vector.extract_strided_slice %22 {offsets = [3, 0], sizes = [1, 128], strides = [1, 1]} : vector<8x128xf32> to vector<1x128xf32>
    %27 = vector.extract_strided_slice %22 {offsets = [4, 0], sizes = [1, 128], strides = [1, 1]} : vector<8x128xf32> to vector<1x128xf32>
    %cst_11 = arith.constant dense<0.000000e+00> : vector<2x128xf32>
    %28 = tpu.matmul %18, %19, %cst_11 {dimension_numbers = #tpu.dot_dimension_numbers<[1], [0], [0], [1], [0, 0, 1, 1], [], []>} : vector<2x16xf32>, vector<16x128xf32>, vector<2x128xf32> -> vector<2x128xf32>
    %29 = vector.broadcast %23 : vector<1x128xf32> to vector<2x128xf32>
    %30 = arith.addf %28, %29 : vector<2x128xf32>
    %cst_12 = arith.constant 0.000000e+00 : f32
    %31 = vector.broadcast %cst_12 : f32 to vector<2x128xf32>
    %32 = arith.cmpf ogt, %30, %31 : vector<2x128xf32>
    %cst_13 = arith.constant 0.00999999977 : f32
    %33 = vector.broadcast %cst_13 : f32 to vector<2x128xf32>
    %34 = arith.mulf %33, %30 : vector<2x128xf32>
    %35 = arith.select %32, %30, %34 : vector<2x128xi1>, vector<2x128xf32>
    %cst_14 = arith.constant dense<0.000000e+00> : vector<2x128xf32>
    %36 = tpu.matmul %35, %20, %cst_14 {dimension_numbers = #tpu.dot_dimension_numbers<[1], [0], [0], [1], [0, 0, 1, 1], [], []>} : vector<2x128xf32>, vector<128x128xf32>, vector<2x128xf32> -> vector<2x128xf32>
    %37 = vector.broadcast %24 : vector<1x128xf32> to vector<2x128xf32>
    %38 = arith.addf %36, %37 : vector<2x128xf32>
    %cst_15 = arith.constant 0.000000e+00 : f32
    %39 = vector.broadcast %cst_15 : f32 to vector<2x128xf32>
    %40 = arith.cmpf ogt, %38, %39 : vector<2x128xf32>
    %cst_16 = arith.constant 0.00999999977 : f32
    %41 = vector.broadcast %cst_16 : f32 to vector<2x128xf32>
    %42 = arith.mulf %41, %38 : vector<2x128xf32>
    %43 = arith.select %40, %38, %42 : vector<2x128xi1>, vector<2x128xf32>
    %cst_17 = arith.constant dense<0.000000e+00> : vector<2x128xf32>
    %44 = tpu.matmul %43, %21, %cst_17 {dimension_numbers = #tpu.dot_dimension_numbers<[1], [0], [0], [1], [0, 0, 1, 1], [], []>} : vector<2x128xf32>, vector<128x128xf32>, vector<2x128xf32> -> vector<2x128xf32>
    %45 = vector.broadcast %25 : vector<1x128xf32> to vector<2x128xf32>
    %46 = arith.addf %44, %45 : vector<2x128xf32>
    %cst_18 = arith.constant 0.000000e+00 : f32
    %47 = vector.broadcast %cst_18 : f32 to vector<2x128xf32>
    %48 = arith.cmpf ogt, %46, %47 : vector<2x128xf32>
    %cst_19 = arith.constant 0.00999999977 : f32
    %49 = vector.broadcast %cst_19 : f32 to vector<2x128xf32>
    %50 = arith.mulf %49, %46 : vector<2x128xf32>
    %51 = arith.select %48, %46, %50 : vector<2x128xi1>, vector<2x128xf32>
    %52 = tpu.iota {dimensions = array<i32: 1>} : vector<2x128xi32>
    %c16_i32 = arith.constant 16 : i32
    %53 = vector.broadcast %c16_i32 : i32 to vector<2x128xi32>
    %54 = arith.cmpi slt, %52, %53 : vector<2x128xi32>
    %55 = arith.extui %54 : vector<2x128xi1> to vector<2x128xi32>
    %56 = arith.sitofp %55 : vector<2x128xi32> to vector<2x128xf32>
    %57 = arith.mulf %51, %56 : vector<2x128xf32>
    %cst_20 = arith.constant dense<0.000000e+00> : vector<2xf32>
    %58 = vector.multi_reduction <add>, %57, %cst_20 [1] : vector<2x128xf32> to vector<2xf32>
    %59 = vector.shape_cast %58 : vector<2xf32> to vector<2x1xf32>
    %cst_21 = arith.constant 6.250000e-02 : f32
    %60 = vector.broadcast %cst_21 : f32 to vector<2x1xf32>
    %61 = arith.mulf %59, %60 : vector<2x1xf32>
    %62 = vector.broadcast %61 : vector<2x1xf32> to vector<2x128xf32>
    %63 = arith.subf %51, %62 : vector<2x128xf32>
    %64 = arith.mulf %63, %56 : vector<2x128xf32>
    %65 = arith.mulf %64, %64 : vector<2x128xf32>
    %cst_22 = arith.constant dense<0.000000e+00> : vector<2xf32>
    %66 = vector.multi_reduction <add>, %65, %cst_22 [1] : vector<2x128xf32> to vector<2xf32>
    %67 = vector.shape_cast %66 : vector<2xf32> to vector<2x1xf32>
    %cst_23 = arith.constant 6.250000e-02 : f32
    %68 = vector.broadcast %cst_23 : f32 to vector<2x1xf32>
    %69 = arith.mulf %67, %68 : vector<2x1xf32>
    %cst_24 = arith.constant 9.99999974E-6 : f32
    %70 = vector.broadcast %cst_24 : f32 to vector<2x1xf32>
    %71 = arith.addf %69, %70 : vector<2x1xf32>
    %72 = math.rsqrt %71 : vector<2x1xf32>
    %73 = vector.broadcast %72 : vector<2x1xf32> to vector<2x128xf32>
    %74 = arith.mulf %64, %73 : vector<2x128xf32>
    %75 = vector.broadcast %26 : vector<1x128xf32> to vector<2x128xf32>
    %76 = arith.mulf %74, %75 : vector<2x128xf32>
    %77 = vector.broadcast %27 : vector<1x128xf32> to vector<2x128xf32>
    %78 = arith.addf %76, %77 : vector<2x128xf32>
    %c0_25 = arith.constant 0 : index
    %c0_26 = arith.constant 0 : index
    %79 = vector.load %arg4[%c0_25, %c0_26] : memref<2x128xf32, #tpu.memory_space<vmem>>, vector<2x128xf32>
    tpu.vector_store %arg4[%c0_25, %c0_26], %78 {strides = array<i32>} : memref<2x128xf32, #tpu.memory_space<vmem>>, vector<2x128xf32>,
    return
  }
}

</mosaic_0001>

<llo_original>
// kernel: tpu_custom_call.1
$region0: #{tpu_custom_call.1}
  #allocation0 [shape = 'u32[]', space=smem, size = 0x4, offset = 0x4, fixed_abs, tag = 'smem constant byte address 0x4 - core index']
  #allocation1 [shape = 'u32[72,128]{1,0:T(1,128)}', space=vmem, size = 0x9000, scoped, tag = 'internal scratch']
  %s0 = inlined_call_operand.hbm [shape: s32[1,16], index: 0, kind: input, shape index: {}]
  %s1 = inlined_call_operand.hbm [shape: f32[16,16], index: 1, kind: input, shape index: {}]
  %s2 = inlined_call_operand.hbm [shape: f32[2,8], index: 2, kind: input, shape index: {}]
  %s3 = inlined_call_operand.hbm [shape: f32[280,128], index: 3, kind: input, shape index: {}]
  %s4 = inlined_call_operand.hbm [shape: f32[2,128], index: 4, kind: output, shape index: {}]
  %s5 = sld [smem:[#allocation0]]
  $region42: #{tpu_custom_call.1} parent=0
    _
  %s7 = ssub.s32 1, %s5
  %s8 = scalar_select 0, %s7, %s5
  $region1: #{tpu_custom_call.1} parent=0
    #allocation2 [shape = 'u8[512]{0}', space=vmem, size = 0x400, scoped, tag = 'input window, operand 0, single buffered']
    #allocation3 [shape = 's32[1]{0}', space=sflag, size = 0x4, scoped, tag = 'scoped memory for tpu_custom_call.1']
    #allocation4 [shape = 's32[1]{0}', space=sflag, size = 0x4, scoped, tag = 'scoped memory for tpu_custom_call.1']
    #allocation5 [shape = 'u8[8192]{0}', space=vmem, size = 0x2000, scoped, tag = 'input window, operand 1, single buffered']
    #allocation6 [shape = 's32[1]{0}', space=sflag, size = 0x4, scoped, tag = 'scoped memory for tpu_custom_call.1']
    #allocation7 [shape = 'u8[1024]{0}', space=vmem, size = 0x400, scoped, tag = 'input window, operand 2, single buffered']
    #allocation8 [shape = 'u8[143360]{0}', space=vmem, size = 0x23000, scoped, tag = 'input window, operand 3, single buffered']
    #allocation9 [shape = 's32[1]{0}', space=sflag, size = 0x4, scoped, tag = 'scoped memory for tpu_custom_call.1']
    #allocation10 [shape = 'u8[1024]{0}', space=vmem, size = 0x400, scoped, tag = 'output window, operand 0, single buffered']
    %9 = vsyncpa [#allocation3], 0
    %10 = vsyncpa [#allocation6], 0
    %11 = vsyncpa [#allocation9], 0
    %12 = vsyncpa [#allocation4], 0
    // Predicated region
    $region2: #{tpu_custom_call.1} parent=1 // pred_check
      _
    $region3: #{tpu_custom_call.1} parent=1 // pred_check_branch
      %14 = sbr.rel (0) target = $region5
    $region4: #{tpu_custom_call.1} parent=1 // pred_region
      %16 = vsyncadd [#allocation3], 0
      %s18 = sshll.u32 %s0, 4
      %s19 = int_to_ptr.hbm [resolvable:$true] %s18
      %s20 = sshll.u32 [#allocation2], 4
      %s21 = int_to_ptr.vmem [resolvable:$true] %s20
      %23 = dma.hbm_to_vmem [thread:$0]  %s19, 16, %s21, [#allocation3]
    $region5: #{tpu_custom_call.1} parent=1 // pred_fallthru
      _
    // Predicated region
    $region6: #{tpu_custom_call.1} parent=1 // pred_check
      _
    $region7: #{tpu_custom_call.1} parent=1 // pred_check_branch
      %25 = sbr.rel (0) target = $region9
    $region8: #{tpu_custom_call.1} parent=1 // pred_region
      %27 = vsyncadd [#allocation6], 0
      %s28 = sshll.u32 %s1, 4
      %s29 = int_to_ptr.hbm [resolvable:$true] %s28
      %s30 = sshll.u32 [#allocation5], 4
      %s31 = int_to_ptr.vmem [resolvable:$true] %s30
      %36 = dma.hbm_to_vmem [thread:$0]  %s29, 256, %s31, [#allocation6], 128, 128, 8
    $region9: #{tpu_custom_call.1} parent=1 // pred_fallthru
      _
    // Predicated region
    $region10: #{tpu_custom_call.1} parent=1 // pred_check
      _
    $region11: #{tpu_custom_call.1} parent=1 // pred_check_branch
      %38 = sbr.rel (0) target = $region13
    $region12: #{tpu_custom_call.1} parent=1 // pred_region
      %40 = vsyncadd [#allocation6], 0
      %s42 = sshll.u32 %s2, 4
      %s43 = int_to_ptr.hbm [resolvable:$true] %s42
      %s44 = sshll.u32 [#allocation7], 4
      %s45 = int_to_ptr.vmem [resolvable:$true] %s44
      %47 = dma.hbm_to_vmem [thread:$0]  %s43, 32, %s45, [#allocation6]
    $region13: #{tpu_custom_call.1} parent=1 // pred_fallthru
      _
    // Predicated region
    $region14: #{tpu_custom_call.1} parent=1 // pred_check
      _
    $region15: #{tpu_custom_call.1} parent=1 // pred_check_branch
      %49 = sbr.rel (0) target = $region17
    $region16: #{tpu_custom_call.1} parent=1 // pred_region
      %51 = vsyncadd [#allocation9], 0
      %s52 = sshll.u32 %s3, 4
      %s53 = int_to_ptr.hbm [resolvable:$true] %s52
      %s54 = sshll.u32 [#allocation8], 4
      %s55 = int_to_ptr.vmem [resolvable:$true] %s54
      %60 = dma.hbm_to_vmem [thread:$0]  %s53, 4480, %s55, [#allocation9], 128, 128, 8
    $region17: #{tpu_custom_call.1} parent=1 // pred_fallthru
      _
    // Predicated region
    $region18: #{tpu_custom_call.1} parent=1 // pred_check
      _
    $region19: #{tpu_custom_call.1} parent=1 // pred_check_branch
      %62 = sbr.rel (0) target = $region21
    $region20: #{tpu_custom_call.1} parent=1 // pred_region
      %64 = dma.done [#allocation3], 16
    $region21: #{tpu_custom_call.1} parent=1 // pred_fallthru
      _
    // Predicated region
    $region22: #{tpu_custom_call.1} parent=1 // pred_check
      _
    $region23: #{tpu_custom_call.1} parent=1 // pred_check_branch
      %66 = sbr.rel (0) target = $region25
    $region24: #{tpu_custom_call.1} parent=1 // pred_region
      %68 = dma.done [#allocation6], 256
    $region25: #{tpu_custom_call.1} parent=1 // pred_fallthru
      _
    // Predicated region
    $region26: #{tpu_custom_call.1} parent=1 // pred_check
      _
    $region27: #{tpu_custom_call.1} parent=1 // pred_check_branch
      %70 = sbr.rel (0) target = $region29
    $region28: #{tpu_custom_call.1} parent=1 // pred_region
      %72 = dma.done [#allocation6], 32
    $region29: #{tpu_custom_call.1} parent=1 // pred_fallthru
      _
    // Predicated region
    $region30: #{tpu_custom_call.1} parent=1 // pred_check
      _
    $region31: #{tpu_custom_call.1} parent=1 // pred_check_branch
      %74 = sbr.rel (0) target = $region33
    $region32: #{tpu_custom_call.1} parent=1 // pred_region
      %76 = dma.done [#allocation9], 4480
    $region33: #{tpu_custom_call.1} parent=1 // pred_fallthru
      _
    %v77 = vld [vmem:[#allocation2] sm:$0x1]
    %v78 = vlaneseq
    %v79 = vshrl.u32 %v78, 7
    %v80 = vperm.slane %v77, 0
    %vm81 = vcmp.eq.s32.totalorder %v79, %v80
    %v82 = vsel %vm81, 1, 0
    %v83 = vcvt.s32.f32 %v82
    %v84 = vld [vmem:[#allocation5] sm:$0xff]
    %v85 = vld [vmem:[#allocation5 + $0x8] sm:$0xff]
    %vm86 = vcmask 130048
    %v88 = vsel %vm86, %v83, 0
    %90 = vmatpush.msra.mxu0 0.0
    %91 = vmatpush.msra.mxu0 0.0
    %92 = vmatpush.msra.mxu0 0.0
    %93 = vmatpush.msra.mxu0 0.0
    %94 = vmatpush.msra.mxu0 0.0
    %95 = vmatpush.msra.mxu0 0.0
    %96 = vmatpush.msra.mxu0 0.0
    %97 = vmatpush.msra.mxu0 0.0
    %98 = vmatpush.msra.mxu0 0.0
    %99 = vmatpush.msra.mxu0 0.0
    %100 = vmatpush.msra.mxu0 0.0
    %101 = vmatpush.msra.mxu0 0.0
    %102 = vmatpush.msra.mxu0 0.0
    %103 = vmatpush.msra.mxu0 0.0
    %104 = vmatpush.msra.mxu0 %v85
    %105 = vmatpush.msra.mxu0 %v84
    %106 = vmatmul.f32.gmra.mxu0 %v88
    %v107 = vpop.f32.mrf.mxu0
    %v108 = vadd.f32 0.0, %v107
    %109 = vdwg.mxu0
    %v110 = vmax.f32 %v108, 1.0
    %v111 = vrcp.pop %v110
    %v112 = vmul.f32 %v110, %v111
    %v113 = vsub.f32 1.0, %v112
    %v114 = vmul.f32 %v111, %v113
    %v115 = vadd.f32 %v111, %v114
    %vm116 = vweird.f32 %v110
    %vm117 = vweird.f32 %v111
    %vm118 = vmor %vm116, %vm117
    %v119 = vsel %vm118, %v111, %v115
    %v120 = vand.u32 2147483647, %v110
    %vm121 = vcmp.eq.f32.partialorder %v120, 8.507059e+37
    %v122 = vand.u32 %v110, 2147483648
    %v123 = vor.u32 1.1754944e-38, %v122
    %v124 = vsel %vm121, %v123, %v119
    %126 = vset.pattern.permute.xlu0 8
    %127 = vperm.xlu0 %126, %v124
    %v128 = vpop.permute.xlu0 %127
    %v130 = vmul.f32 %v108, %v128
    %v131 = vld [vmem:[#allocation7] sm:$0x3]
    %133 = vrot.lane.b32.xlu0 %v130, 8
    %v134 = vpop.permute.xlu0 %133
    %vm136 = vcmask 64512
    %v137 = vsel %vm136, %v131, %v134
    %v138 = vld [vmem:[#allocation8] sm:$0xff]
    %v139 = vld [vmem:[#allocation8 + $0x8] sm:$0xff]
    %v140 = vld [vmem:[#allocation8 + $0x10] sm:$0xff]
    %v141 = vld [vmem:[#allocation8 + $0x18] sm:$0xff]
    %v142 = vld [vmem:[#allocation8 + $0x20] sm:$0xff]
    %v143 = vld [vmem:[#allocation8 + $0x28] sm:$0xff]
    %v144 = vld [vmem:[#allocation8 + $0x30] sm:$0xff]
    %v145 = vld [vmem:[#allocation8 + $0x38] sm:$0xff]
    %v146 = vld [vmem:[#allocation8 + $0x40] sm:$0xff]
    %v147 = vld [vmem:[#allocation8 + $0x48] sm:$0xff]
    %v148 = vld [vmem:[#allocation8 + $0x50] sm:$0xff]
    %v149 = vld [vmem:[#allocation8 + $0x58] sm:$0xff]
    %v150 = vld [vmem:[#allocation8 + $0x60] sm:$0xff]
    %v151 = vld [vmem:[#allocation8 + $0x68] sm:$0xff]
    %v152 = vld [vmem:[#allocation8 + $0x70] sm:$0xff]
    %v153 = vld [vmem:[#allocation8 + $0x78] sm:$0xff]
    %v154 = vld [vmem:[#allocation8 + $0x80] sm:$0xff]
    %v155 = vld [vmem:[#allocation8 + $0x88] sm:$0xff]
    %v156 = vld [vmem:[#allocation8 + $0x90] sm:$0xff]
    %v157 = vld [vmem:[#allocation8 + $0x98] sm:$0xff]
    %v158 = vld [vmem:[#allocation8 + $0xa0] sm:$0xff]
    %v159 = vld [vmem:[#allocation8 + $0xa8] sm:$0xff]
    %v160 = vld [vmem:[#allocation8 + $0xb0] sm:$0xff]
    %v161 = vld [vmem:[#allocation8 + $0xb8] sm:$0xff]
    %v162 = vld [vmem:[#allocation8 + $0xc0] sm:$0xff]
    %v163 = vld [vmem:[#allocation8 + $0xc8] sm:$0xff]
    %v164 = vld [vmem:[#allocation8 + $0xd0] sm:$0xff]
    %v165 = vld [vmem:[#allocation8 + $0xd8] sm:$0xff]
    %v166 = vld [vmem:[#allocation8 + $0xe0] sm:$0xff]
    %v167 = vld [vmem:[#allocation8 + $0xe8] sm:$0xff]
    %v168 = vld [vmem:[#allocation8 + $0xf0] sm:$0xff]
    %v169 = vld [vmem:[#allocation8 + $0xf8] sm:$0xff]
    %v170 = vld [vmem:[#allocation8 + $0x100] sm:$0xff]
    %v171 = vld [vmem:[#allocation8 + $0x108] sm:$0xff]
    %v172 = vld [vmem:[#allocation8 + $0x110] sm:$0xff]
    %v173 = vperm.slane %v172, 0
    %v175 = vsel %vm86, %v137, 0
    %177 = vmatpush.msra.mxu0 0.0
    %178 = vmatpush.msra.mxu0 0.0
    %179 = vmatpush.msra.mxu0 0.0
    %180 = vmatpush.msra.mxu0 0.0
    %181 = vmatpush.msra.mxu0 0.0
    %182 = vmatpush.msra.mxu0 0.0
    %183 = vmatpush.msra.mxu0 0.0
    %184 = vmatpush.msra.mxu0 0.0
    %185 = vmatpush.msra.mxu0 0.0
    %186 = vmatpush.msra.mxu0 0.0
    %187 = vmatpush.msra.mxu0 0.0
    %188 = vmatpush.msra.mxu0 0.0
    %189 = vmatpush.msra.mxu0 0.0
    %190 = vmatpush.msra.mxu0 0.0
    %191 = vmatpush.msra.mxu0 %v139
    %192 = vmatpush.msra.mxu0 %v138
    %193 = vmatmul.f32.gmra.mxu0 %v175
    %v194 = vpop.f32.mrf.mxu0
    %v195 = vadd.f32 %v173, %v194
    %196 = vdwg.mxu0
    %vm197 = vcmp.gt.f32.partialorder %v195, 0.0
    %v198 = vmul.f32 %v195, 0.01
    %v199 = vsel %vm197, %v195, %v198
    %v200 = vperm.slane %v172, 1
    %201 = vmatpush.msra.mxu0 %v155
    %202 = vmatpush.msra.mxu0 %v154
    %203 = vmatpush.msra.mxu0 %v153
    %204 = vmatpush.msra.mxu0 %v152
    %205 = vmatpush.msra.mxu0 %v151
    %206 = vmatpush.msra.mxu0 %v150
    %207 = vmatpush.msra.mxu0 %v149
    %208 = vmatpush.msra.mxu0 %v148
    %209 = vmatpush.msra.mxu0 %v147
    %210 = vmatpush.msra.mxu0 %v146
    %211 = vmatpush.msra.mxu0 %v145
    %212 = vmatpush.msra.mxu0 %v144
    %213 = vmatpush.msra.mxu0 %v143
    %214 = vmatpush.msra.mxu0 %v142
    %215 = vmatpush.msra.mxu0 %v141
    %216 = vmatpush.msra.mxu0 %v140
    %217 = vmatmul.f32.gmra.mxu0 %v199
    %v218 = vpop.f32.mrf.mxu0
    %v219 = vadd.f32 %v200, %v218
    %220 = vdwg.mxu0
    %vm221 = vcmp.gt.f32.partialorder %v219, 0.0
    %v222 = vmul.f32 %v219, 0.01
    %v223 = vsel %vm221, %v219, %v222
    %v224 = vperm.slane %v172, 2
    %225 = vmatpush.msra.mxu0 %v171
    %226 = vmatpush.msra.mxu0 %v170
    %227 = vmatpush.msra.mxu0 %v169
    %228 = vmatpush.msra.mxu0 %v168
    %229 = vmatpush.msra.mxu0 %v167
    %230 = vmatpush.msra.mxu0 %v166
    %231 = vmatpush.msra.mxu0 %v165
    %232 = vmatpush.msra.mxu0 %v164
    %233 = vmatpush.msra.mxu0 %v163
    %234 = vmatpush.msra.mxu0 %v162
    %235 = vmatpush.msra.mxu0 %v161
    %236 = vmatpush.msra.mxu0 %v160
    %237 = vmatpush.msra.mxu0 %v159
    %238 = vmatpush.msra.mxu0 %v158
    %239 = vmatpush.msra.mxu0 %v157
    %240 = vmatpush.msra.mxu0 %v156
    %241 = vmatmul.f32.gmra.mxu0 %v223
    %v242 = vpop.f32.mrf.mxu0
    %v243 = vadd.f32 %v224, %v242
    %244 = vdwg.mxu0
    %vm245 = vcmp.gt.f32.partialorder %v243, 0.0
    %v246 = vmul.f32 %v243, 0.01
    %v247 = vsel %vm245, %v243, %v246
    %v248 = vlaneseq
    %v249 = vand.u32 %v248, 127
    %vm250 = vcmp.lt.s32.totalorder %v249, 16
    %v251 = vsel %vm250, 1, 0
    %v252 = vcvt.s32.f32 %v251
    %v253 = vmul.f32 %v247, %v252
    %vm254 = vcmask 1041408
    %v255 = vsel %vm254, %v253, 0.0
    %256 = vadd.xlane.f32.xlu0 %v255
    %v257 = vpop.xlane.xlu0 %256
    %v258 = vmul.f32 %v257, 0.0625
    %v259 = vsub.f32 %v247, %v258
    %v260 = vmul.f32 %v259, %v252
    %v261 = vmul.f32 %v260, %v260
    %v262 = vsel %vm254, %v261, 0.0
    %263 = vadd.xlane.f32.xlu0 %v262
    %v264 = vpop.xlane.xlu0 %263
    %v265 = vmul.f32 %v264, 0.0625
    %v266 = vadd.f32 %v265, 1e-05
    %v267 = vrsqrt.pop %v266
    %v268 = vmul.f32 %v267, %v266
    %v269 = vmul.f32 %v268, %v267
    %v270 = vmul.f32 0.5, %v269
    %v271 = vsub.f32 1.5, %v270
    %v272 = vmul.f32 %v267, %v271
    %vm273 = vweird.f32 %v266
    %vm274 = vweird.f32 %v267
    %vm275 = vmor %vm273, %vm274
    %v276 = vsel %vm275, %v267, %v272
    %v277 = vmul.f32 %v260, %v276
    %v278 = vperm.slane %v172, 3
    %v279 = vmul.f32 %v277, %v278
    %v280 = vperm.slane %v172, 4
    %v281 = vadd.f32 %v279, %v280
    %282 = vst [vmem:[#allocation10] sm:$0x3] %v281
    // Predicated region
    $region34: #{tpu_custom_call.1} parent=1 // pred_check
      _
    $region35: #{tpu_custom_call.1} parent=1 // pred_check_branch
      %284 = sbr.rel (0) target = $region37
    $region36: #{tpu_custom_call.1} parent=1 // pred_region
      %286 = vsyncadd [#allocation4], 0
      %s288 = sshll.u32 [#allocation10], 4
      %s289 = int_to_ptr.vmem [resolvable:$true] %s288
      %s290 = sshll.u32 %s4, 4
      %s291 = int_to_ptr.hbm [resolvable:$true] %s290
      %293 = dma.vmem_to_hbm [thread:$0]  %s289, 32, %s291, [#allocation4]
    $region37: #{tpu_custom_call.1} parent=1 // pred_fallthru
      _
    // Predicated region
    $region38: #{tpu_custom_call.1} parent=1 // pred_check
      _
    $region39: #{tpu_custom_call.1} parent=1 // pred_check_branch
      %295 = sbr.rel (0) target = $region41
    $region40: #{tpu_custom_call.1} parent=1 // pred_region
      %297 = dma.done [#allocation4], 32
    $region41: #{tpu_custom_call.1} parent=1 // pred_fallthru
      _
    %298 = vsyncpa [#allocation3], 1
    %299 = vsyncpa [#allocation6], 1
    %300 = vsyncpa [#allocation9], 1
    %301 = vsyncpa [#allocation4], 1

</llo_original>
